<compile_context>
chip_gen: v7x
topology: tpu7x:2x2x1
jax: 0.10.0
libtpu: 0.0.40
codegen_flags: <defaults>
</compile_context>

<pallas_src>
import functools

import jax
import jax.numpy as jnp
from jax.experimental import pallas as pl
from jax.experimental.pallas import tpu as pltpu

HIDDEN = 64


def _round_up(n, m):
    return ((n + m - 1) // m) * m


def qnet_kernel(x_ref, w1_ref, b1_ref, w2_ref, b2_ref, w3_ref, b3_ref, out_ref):
    # Layer 1: x @ W1 + b1, ReLU   (accumulate in f32 on the MXU)
    h1 = jnp.dot(x_ref[...], w1_ref[...], preferred_element_type=jnp.float32)
    h1 = jnp.maximum(h1 + b1_ref[...], 0.0)
    # Layer 2: h1 @ W2 + b2, ReLU  (cast activation to weight dtype for the MXU)
    h2 = jnp.dot(h1.astype(w2_ref.dtype), w2_ref[...],
                 preferred_element_type=jnp.float32)
    h2 = jnp.maximum(h2 + b2_ref[...], 0.0)
    # Layer 3: h2 @ W3 + b3  (Q-values, no activation; W3/b3 are lane-padded)
    q = jnp.dot(h2.astype(w3_ref.dtype), w3_ref[...],
                preferred_element_type=jnp.float32)
    out_ref[...] = (q + b3_ref[...]).astype(out_ref.dtype)


def qnet_forward(x, params, *, compute_dtype=jnp.float32, tb=None):
    """x: (B, state_size) f32.  params: dict of w1,b1,w2,b2,w3,b3.

    Returns (B, action_size) f32 Q-values.
    """
    w1 = params["w1"].astype(compute_dtype)
    w2 = params["w2"].astype(compute_dtype)
    w3 = params["w3"].astype(compute_dtype)
    b1 = params["b1"].astype(jnp.float32)
    b2 = params["b2"].astype(jnp.float32)
    b3 = params["b3"].astype(jnp.float32)

    B, state_size = x.shape
    action_size = w3.shape[1]

    # Batch tile: multiple of 8 (f32 sublane); 256 fills the MXU M-dim on
    # v6e/v7x for large batches, while tiny batches use a single padded tile.
    if tb is None:
        tb = 256 if B >= 256 else max(8, _round_up(B, 8))
    Bp = _round_up(B, tb)
    xp = x.astype(compute_dtype)
    if Bp != B:
        xp = jnp.pad(xp, ((0, Bp - B), (0, 0)))

    # Lane-dense output: pad last layer to a multiple of 128 output columns.
    out_pad = max(128, _round_up(action_size, 128))
    w3p = jnp.pad(w3, ((0, 0), (0, out_pad - action_size)))
    b3p = jnp.pad(b3, ((0, 0), (0, out_pad - action_size)))

    grid = (Bp // tb,)

    # Advisory cost estimate for XLA's scheduler.
    cost = pl.estimate_cost(
        lambda xx, a1, c1, a2, c2, a3, c3:
            jnp.maximum(jnp.maximum(xx @ a1 + c1, 0.0) @ a2 + c2, 0.0) @ a3 + c3,
        xp, w1, b1, w2, b2, w3p, b3p,
    )

    out = pl.pallas_call(
        qnet_kernel,
        out_shape=jax.ShapeDtypeStruct((Bp, out_pad), jnp.float32),
        grid=grid,
        in_specs=[
            pl.BlockSpec((tb, state_size), lambda i: (i, 0)),       # x (tiled)
            pl.BlockSpec((state_size, HIDDEN), lambda i: (0, 0)),   # w1 (resident)
            pl.BlockSpec((1, HIDDEN), lambda i: (0, 0)),            # b1
            pl.BlockSpec((HIDDEN, HIDDEN), lambda i: (0, 0)),       # w2
            pl.BlockSpec((1, HIDDEN), lambda i: (0, 0)),            # b2
            pl.BlockSpec((HIDDEN, out_pad), lambda i: (0, 0)),      # w3 (padded)
            pl.BlockSpec((1, out_pad), lambda i: (0, 0)),           # b3 (padded)
        ],
        out_specs=pl.BlockSpec((tb, out_pad), lambda i: (i, 0)),
        compiler_params=pltpu.CompilerParams(
            dimension_semantics=("parallel",)),
        cost_estimate=cost,
    )(xp, w1, b1, w2, b2, w3p, b3p)

    return out[:B, :action_size]


def init_qnet_params(key, state_size, action_size, hidden=HIDDEN):
    """Deterministic init mimicking PyTorch nn.Linear default:
    U(-1/sqrt(fan_in), 1/sqrt(fan_in)) for both weights and biases."""
    keys = jax.random.split(key, 6)

    def linear(kw, kb, fan_in, fan_out):
        bound = 1.0 / jnp.sqrt(jnp.float32(fan_in))
        w = jax.random.uniform(kw, (fan_in, fan_out), jnp.float32, -bound, bound)
        b = jax.random.uniform(kb, (1, fan_out), jnp.float32, -bound, bound)
        return w, b

    w1, b1 = linear(keys[0], keys[1], state_size, hidden)
    w2, b2 = linear(keys[2], keys[3], hidden, hidden)
    w3, b3 = linear(keys[4], keys[5], hidden, action_size)
    return {"w1": w1, "b1": b1, "w2": w2, "b2": b2, "w3": w3, "b3": b3}


def qnet_reference(x, params):
    """Plain-JAX reference for correctness check."""
    h1 = jnp.maximum(x @ params["w1"] + params["b1"], 0.0)
    h2 = jnp.maximum(h1 @ params["w2"] + params["b2"], 0.0)
    return h2 @ params["w3"] + params["b3"]


if __name__ == "__main__":
    key = jax.random.PRNGKey(0)
    k_param, k_x = jax.random.split(key)

    batch_size = 64
    state_size = 8
    action_size = 4

    params = init_qnet_params(k_param, state_size, action_size, hidden=HIDDEN)
    x = jax.random.normal(k_x, (batch_size, state_size), jnp.float32)
    ref = qnet_reference(x, params)

    # f32 path (exact-ish vs reference).
    out = qnet_forward(x, params, compute_dtype=jnp.float32)
    out = jax.block_until_ready(out)
    assert out.shape == (batch_size, action_size)
    assert jnp.allclose(out, ref, atol=1e-4, rtol=1e-4), "f32 mismatch vs reference"

    # bf16 weights/activations (f32 accumulation) — looser tolerance.
    out_bf16 = qnet_forward(x, params, compute_dtype=jnp.bfloat16)
    out_bf16 = jax.block_until_ready(out_bf16)
    assert jnp.allclose(out_bf16, ref, atol=5e-2, rtol=5e-2), "bf16 mismatch vs reference"

    print("KERNEL_OK")
</pallas_src>

<mosaic_0001>
module attributes {stable_mosaic.version = 11 : i64} {
  func.func @qnet_kernel(%arg0: i32, %arg1: memref<64x8xf32, #tpu.memory_space<vmem>>, %arg2: memref<8x64xf32, #tpu.memory_space<vmem>>, %arg3: memref<1x64xf32, #tpu.memory_space<vmem>>, %arg4: memref<64x64xf32, #tpu.memory_space<vmem>>, %arg5: memref<1x64xf32, #tpu.memory_space<vmem>>, %arg6: memref<64x128xf32, #tpu.memory_space<vmem>>, %arg7: memref<1x128xf32, #tpu.memory_space<vmem>>, %arg8: memref<64x128xf32, #tpu.memory_space<vmem>>) attributes {dimension_semantics = [#tpu.dimension_semantics<parallel>], iteration_bounds = array<i64: 1>, scalar_prefetch = 0 : i64, scratch_operands = 0 : i64, tpu.core_type = #tpu.core_type<tc>, window_params = [{transform_indices = @transform_0, window_bounds = array<i64: 64, 8>}, {pipeline_mode = #tpu.pipeline_mode<synchronous>, transform_indices = @transform_1, window_bounds = array<i64: 8, 64>}, {pipeline_mode = #tpu.pipeline_mode<synchronous>, transform_indices = @transform_2, window_bounds = array<i64: 1, 64>}, {pipeline_mode = #tpu.pipeline_mode<synchronous>, transform_indices = @transform_3, window_bounds = array<i64: 64, 64>}, {pipeline_mode = #tpu.pipeline_mode<synchronous>, transform_indices = @transform_4, window_bounds = array<i64: 1, 64>}, {pipeline_mode = #tpu.pipeline_mode<synchronous>, transform_indices = @transform_5, window_bounds = array<i64: 64, 128>}, {pipeline_mode = #tpu.pipeline_mode<synchronous>, transform_indices = @transform_6, window_bounds = array<i64: 1, 128>}, {transform_indices = @transform_7, window_bounds = array<i64: 64, 128>}]} {
    %c0 = arith.constant 0 : index
    %c0_0 = arith.constant 0 : index
    %0 = vector.load %arg1[%c0, %c0_0] : memref<64x8xf32, #tpu.memory_space<vmem>>, vector<64x8xf32>
    %c0_1 = arith.constant 0 : index
    %c0_2 = arith.constant 0 : index
    %1 = vector.load %arg2[%c0_1, %c0_2] : memref<8x64xf32, #tpu.memory_space<vmem>>, vector<8x64xf32>
    %cst = arith.constant dense<0.000000e+00> : vector<64x64xf32>
    %2 = tpu.matmul %0, %1, %cst {dimension_numbers = #tpu.dot_dimension_numbers<[1], [0], [0], [1], [0, 0, 1, 1], [], []>} : vector<64x8xf32>, vector<8x64xf32>, vector<64x64xf32> -> vector<64x64xf32>
    %c0_3 = arith.constant 0 : index
    %c0_4 = arith.constant 0 : index
    %3 = vector.load %arg3[%c0_3, %c0_4] : memref<1x64xf32, #tpu.memory_space<vmem>>, vector<1x64xf32>
    %4 = vector.broadcast %3 : vector<1x64xf32> to vector<64x64xf32>
    %5 = arith.addf %2, %4 : vector<64x64xf32>
    %cst_5 = arith.constant 0.000000e+00 : f32
    %6 = vector.broadcast %cst_5 : f32 to vector<64x64xf32>
    %7 = arith.maximumf %5, %6 : vector<64x64xf32>
    %c0_6 = arith.constant 0 : index
    %c0_7 = arith.constant 0 : index
    %8 = vector.load %arg4[%c0_6, %c0_7] : memref<64x64xf32, #tpu.memory_space<vmem>>, vector<64x64xf32>
    %cst_8 = arith.constant dense<0.000000e+00> : vector<64x64xf32>
    %9 = tpu.matmul %7, %8, %cst_8 {dimension_numbers = #tpu.dot_dimension_numbers<[1], [0], [0], [1], [0, 0, 1, 1], [], []>} : vector<64x64xf32>, vector<64x64xf32>, vector<64x64xf32> -> vector<64x64xf32>
    %c0_9 = arith.constant 0 : index
    %c0_10 = arith.constant 0 : index
    %10 = vector.load %arg5[%c0_9, %c0_10] : memref<1x64xf32, #tpu.memory_space<vmem>>, vector<1x64xf32>
    %11 = vector.broadcast %10 : vector<1x64xf32> to vector<64x64xf32>
    %12 = arith.addf %9, %11 : vector<64x64xf32>
    %cst_11 = arith.constant 0.000000e+00 : f32
    %13 = vector.broadcast %cst_11 : f32 to vector<64x64xf32>
    %14 = arith.maximumf %12, %13 : vector<64x64xf32>
    %c0_12 = arith.constant 0 : index
    %c0_13 = arith.constant 0 : index
    %15 = vector.load %arg6[%c0_12, %c0_13] : memref<64x128xf32, #tpu.memory_space<vmem>>, vector<64x128xf32>
    %cst_14 = arith.constant dense<0.000000e+00> : vector<64x128xf32>
    %16 = tpu.matmul %14, %15, %cst_14 {dimension_numbers = #tpu.dot_dimension_numbers<[1], [0], [0], [1], [0, 0, 1, 1], [], []>} : vector<64x64xf32>, vector<64x128xf32>, vector<64x128xf32> -> vector<64x128xf32>
    %c0_15 = arith.constant 0 : index
    %c0_16 = arith.constant 0 : index
    %17 = vector.load %arg7[%c0_15, %c0_16] : memref<1x128xf32, #tpu.memory_space<vmem>>, vector<1x128xf32>
    %18 = vector.broadcast %17 : vector<1x128xf32> to vector<64x128xf32>
    %19 = arith.addf %16, %18 : vector<64x128xf32>
    %c0_17 = arith.constant 0 : index
    %c0_18 = arith.constant 0 : index
    %20 = vector.load %arg8[%c0_17, %c0_18] : memref<64x128xf32, #tpu.memory_space<vmem>>, vector<64x128xf32>
    tpu.vector_store %arg8[%c0_17, %c0_18], %19 {strides = array<i32>} : memref<64x128xf32, #tpu.memory_space<vmem>>, vector<64x128xf32>,
    return
  }
  func.func @transform_0(%arg0: i32) -> (i32, i32) {
    %c0_i32 = arith.constant 0 : i32
    %c0_i32_0 = arith.constant 0 : i32
    return %arg0, %c0_i32 : i32, i32
  }
  func.func @transform_1(%arg0: i32) -> (i32, i32) {
    %c0_i32 = arith.constant 0 : i32
    %c0_i32_0 = arith.constant 0 : i32
    %c0_i32_1 = arith.constant 0 : i32
    return %c0_i32, %c0_i32_0 : i32, i32
  }
  func.func @transform_2(%arg0: i32) -> (i32, i32) {
    %c0_i32 = arith.constant 0 : i32
    %c0_i32_0 = arith.constant 0 : i32
    %c0_i32_1 = arith.constant 0 : i32
    return %c0_i32, %c0_i32_0 : i32, i32
  }
  func.func @transform_3(%arg0: i32) -> (i32, i32) {
    %c0_i32 = arith.constant 0 : i32
    %c0_i32_0 = arith.constant 0 : i32
    %c0_i32_1 = arith.constant 0 : i32
    return %c0_i32, %c0_i32_0 : i32, i32
  }
  func.func @transform_4(%arg0: i32) -> (i32, i32) {
    %c0_i32 = arith.constant 0 : i32
    %c0_i32_0 = arith.constant 0 : i32
    %c0_i32_1 = arith.constant 0 : i32
    return %c0_i32, %c0_i32_0 : i32, i32
  }
  func.func @transform_5(%arg0: i32) -> (i32, i32) {
    %c0_i32 = arith.constant 0 : i32
    %c0_i32_0 = arith.constant 0 : i32
    %c0_i32_1 = arith.constant 0 : i32
    return %c0_i32, %c0_i32_0 : i32, i32
  }
  func.func @transform_6(%arg0: i32) -> (i32, i32) {
    %c0_i32 = arith.constant 0 : i32
    %c0_i32_0 = arith.constant 0 : i32
    %c0_i32_1 = arith.constant 0 : i32
    return %c0_i32, %c0_i32_0 : i32, i32
  }
  func.func @transform_7(%arg0: i32) -> (i32, i32) {
    %c0_i32 = arith.constant 0 : i32
    %c0_i32_0 = arith.constant 0 : i32
    return %arg0, %c0_i32 : i32, i32
  }
}

</mosaic_0001>

<llo_original>
// kernel: tpu_custom_call.1
$region0: #{tpu_custom_call.1}
  #allocation0 [shape = 'u32[]', space=smem, size = 0x4, offset = 0x4, fixed_abs, tag = 'smem constant byte address 0x4 - core index']
  #allocation1 [shape = 'u32[144,128]{1,0:T(1,128)}', space=vmem, size = 0x12000, scoped, tag = 'internal scratch']
  %s0 = inlined_call_operand.vmem [shape: f32[64,8], index: 0, kind: input, shape index: {}]
  %s1 = inlined_call_operand.vmem [shape: f32[8,64], index: 1, kind: input, shape index: {}]
  %s2 = inlined_call_operand.vmem [shape: f32[1,64], index: 2, kind: input, shape index: {}]
  %s3 = inlined_call_operand.vmem [shape: f32[64,64], index: 3, kind: input, shape index: {}]
  %s4 = inlined_call_operand.vmem [shape: f32[1,64], index: 4, kind: input, shape index: {}]
  %s5 = inlined_call_operand.hbm [shape: f32[64,128], index: 5, kind: input, shape index: {}]
  %s6 = inlined_call_operand.vmem [shape: f32[1,128], index: 6, kind: input, shape index: {}]
  %s7 = inlined_call_operand.hbm [shape: f32[64,128], index: 7, kind: output, shape index: {}]
  %s8 = sld [smem:[#allocation0]]
  $region42: #{tpu_custom_call.1} parent=0
    _
  %s10 = ssub.s32 1, %s8
  %s11 = scalar_select 0, %s10, %s8
  $region1: #{tpu_custom_call.1} parent=0
    #allocation2 [shape = 'u8[32768]{0}', space=vmem, size = 0x8000, scoped, tag = 'input window, operand 5, single buffered']
    #allocation3 [shape = 's32[1]{0}', space=sflag, size = 0x4, scoped, tag = 'scoped memory for tpu_custom_call.1']
    #allocation4 [shape = 's32[1]{0}', space=sflag, size = 0x4, scoped, tag = 'scoped memory for tpu_custom_call.1']
    #allocation5 [shape = 'u8[32768]{0}', space=vmem, size = 0x8000, scoped, tag = 'output window, operand 0, single buffered']
    %12 = vsyncpa [#allocation3], 0
    %13 = vsyncpa [#allocation4], 0
    // Predicated region
    $region2: #{tpu_custom_call.1} parent=1 // pred_check
      _
    $region3: #{tpu_custom_call.1} parent=1 // pred_check_branch
      %15 = sbr.rel (0) target = $region5
    $region4: #{tpu_custom_call.1} parent=1 // pred_region
      _
    $region5: #{tpu_custom_call.1} parent=1 // pred_fallthru
      _
    // Predicated region
    $region6: #{tpu_custom_call.1} parent=1 // pred_check
      _
    $region7: #{tpu_custom_call.1} parent=1 // pred_check_branch
      %17 = sbr.rel (0) target = $region9
    $region8: #{tpu_custom_call.1} parent=1 // pred_region
      _
    $region9: #{tpu_custom_call.1} parent=1 // pred_fallthru
      _
    // Predicated region
    $region10: #{tpu_custom_call.1} parent=1 // pred_check
      _
    $region11: #{tpu_custom_call.1} parent=1 // pred_check_branch
      %19 = sbr.rel (0) target = $region13
    $region12: #{tpu_custom_call.1} parent=1 // pred_region
      _
    $region13: #{tpu_custom_call.1} parent=1 // pred_fallthru
      _
    // Predicated region
    $region14: #{tpu_custom_call.1} parent=1 // pred_check
      _
    $region15: #{tpu_custom_call.1} parent=1 // pred_check_branch
      %21 = sbr.rel (0) target = $region17
    $region16: #{tpu_custom_call.1} parent=1 // pred_region
      _
    $region17: #{tpu_custom_call.1} parent=1 // pred_fallthru
      _
    // Predicated region
    $region18: #{tpu_custom_call.1} parent=1 // pred_check
      _
    $region19: #{tpu_custom_call.1} parent=1 // pred_check_branch
      %23 = sbr.rel (0) target = $region21
    $region20: #{tpu_custom_call.1} parent=1 // pred_region
      _
    $region21: #{tpu_custom_call.1} parent=1 // pred_fallthru
      _
    // Predicated region
    $region22: #{tpu_custom_call.1} parent=1 // pred_check
      _
    $region23: #{tpu_custom_call.1} parent=1 // pred_check_branch
      %25 = sbr.rel (0) target = $region25
    $region24: #{tpu_custom_call.1} parent=1 // pred_region
      %s27 = ssub.s32 1024, 1024
      %28 = vsyncadd [#allocation3], %s27
      %s29 = sshll.u32 [#allocation2], 4
      %s30 = int_to_ptr.vmem [resolvable:$true] %s29
      %35 = dma.hbm_to_vmem [thread:$0]  %s5, 1024, %s30, [#allocation3], 128, 128, 8
    $region25: #{tpu_custom_call.1} parent=1 // pred_fallthru
      _
    // Predicated region
    $region26: #{tpu_custom_call.1} parent=1 // pred_check
      _
    $region27: #{tpu_custom_call.1} parent=1 // pred_check_branch
      %37 = sbr.rel (0) target = $region29
    $region28: #{tpu_custom_call.1} parent=1 // pred_region
      _
    $region29: #{tpu_custom_call.1} parent=1 // pred_fallthru
      _
    // Predicated region
    $region30: #{tpu_custom_call.1} parent=1 // pred_check
      _
    $region31: #{tpu_custom_call.1} parent=1 // pred_check_branch
      %39 = sbr.rel (0) target = $region33
    $region32: #{tpu_custom_call.1} parent=1 // pred_region
      %40 = dma.done [#allocation3], 1024
    $region33: #{tpu_custom_call.1} parent=1 // pred_fallthru
      _
    %v41 = vld [vmem:[%s0] sm:$0xff]
    %v42 = vld [vmem:[%s0 + $0x8] sm:$0xff]
    %v43 = vld [vmem:[%s0 + $0x10] sm:$0xff]
    %v44 = vld [vmem:[%s0 + $0x18] sm:$0xff]
    %v45 = vld [vmem:[%s0 + $0x20] sm:$0xff]
    %v46 = vld [vmem:[%s0 + $0x28] sm:$0xff]
    %v47 = vld [vmem:[%s0 + $0x30] sm:$0xff]
    %v48 = vld [vmem:[%s0 + $0x38] sm:$0xff]
    %v49 = vld [vmem:[%s1] sm:$0xff]
    %v50 = vld [vmem:[%s2] sm:$0x1]
    %v52 = vlaneseq
    %v53 = vshrl.u32 %v52, 7
    %v54 = vsub.s32 0, %v53
    %v55 = vrot.slane %v50, %v54
    %vm57 = vcmask 64512
    %v59 = vsel %vm57, %v41, 0
    %v62 = vsel %vm57, %v42, 0
    %v65 = vsel %vm57, %v43, 0
    %v68 = vsel %vm57, %v44, 0
    %v71 = vsel %vm57, %v45, 0
    %v74 = vsel %vm57, %v46, 0
    %v77 = vsel %vm57, %v47, 0
    %v80 = vsel %vm57, %v48, 0
    %82 = vmatprep.subr.mxu0 0.0
    %83 = vmatpush1.msra.mxu0 %v49
    %84 = vmatprep.subr.mxu0 0.0
    %85 = vmatpush1.msra.mxu0 0.0
    %86 = vmatprep.subr.mxu0 0.0
    %87 = vmatpush1.msra.mxu0 0.0
    %88 = vmatprep.subr.mxu0 0.0
    %89 = vmatpush1.msra.mxu0 0.0
    %90 = vmatprep.subr.mxu0 0.0
    %91 = vmatpush1.msra.mxu0 0.0
    %92 = vmatprep.subr.mxu0 0.0
    %93 = vmatpush1.msra.mxu0 0.0
    %94 = vmatprep.subr.mxu0 0.0
    %95 = vmatpush1.msra.mxu0 0.0
    %96 = vmatprep.subr.mxu0 0.0
    %97 = vmatpush1.msra.mxu0 0.0
    %98 = vmatprep.subr.mxu0 0.0
    %99 = vmatpush1.msra.mxu0 0.0
    %100 = vmatprep.subr.mxu0 0.0
    %101 = vmatpush1.msra.mxu0 0.0
    %102 = vmatprep.subr.mxu0 0.0
    %103 = vmatpush1.msra.mxu0 0.0
    %104 = vmatprep.subr.mxu0 0.0
    %105 = vmatpush1.msra.mxu0 0.0
    %106 = vmatprep.subr.mxu0 0.0
    %107 = vmatpush1.msra.mxu0 0.0
    %108 = vmatprep.subr.mxu0 0.0
    %109 = vmatpush1.msra.mxu0 0.0
    %110 = vmatprep.subr.mxu0 0.0
    %111 = vmatpush1.msra.mxu0 0.0
    %112 = vmatprep.subr.mxu0 0.0
    %113 = vmatpush1.msra.mxu0 0.0
    %114 = vmatprep.subr.mxu0 0.0
    %115 = vmatpush1.msra.mxu0 0.0
    %116 = vmatprep.subr.mxu0 0.0
    %117 = vmatpush1.msra.mxu0 0.0
    %118 = vmatprep.subr.mxu0 0.0
    %119 = vmatpush1.msra.mxu0 0.0
    %120 = vmatprep.subr.mxu0 0.0
    %121 = vmatpush1.msra.mxu0 0.0
    %122 = vmatprep.subr.mxu0 0.0
    %123 = vmatpush1.msra.mxu0 0.0
    %124 = vmatprep.subr.mxu0 0.0
    %125 = vmatpush1.msra.mxu0 0.0
    %126 = vmatprep.subr.mxu0 0.0
    %127 = vmatpush1.msra.mxu0 0.0
    %128 = vmatprep.subr.mxu0 0.0
    %129 = vmatpush1.msra.mxu0 0.0
    %130 = vmatprep.subr.mxu0 0.0
    %131 = vmatpush1.msra.mxu0 0.0
    %132 = vmatprep.subr.mxu0 0.0
    %133 = vmatpush1.msra.mxu0 0.0
    %134 = vmatprep.subr.mxu0 0.0
    %135 = vmatpush1.msra.mxu0 0.0
    %136 = vmatprep.subr.mxu0 0.0
    %137 = vmatpush1.msra.mxu0 0.0
    %138 = vmatprep.subr.mxu0 0.0
    %139 = vmatpush1.msra.mxu0 0.0
    %140 = vmatprep.subr.mxu0 0.0
    %141 = vmatpush1.msra.mxu0 0.0
    %142 = vmatprep.subr.mxu0 0.0
    %143 = vmatpush1.msra.mxu0 0.0
    %144 = vmatprep.subr.mxu0 0.0
    %145 = vmatpush1.msra.mxu0 0.0
    %146 = vmatprep.mubr.f32.mxu0 0.0
    %147 = vmatmul.mubr.f32.gmra.mrb[0].mxu0 %v59
    %v148 = vpop.f32.mrb[0].mxu0
    %v149 = vadd.f32 %v55, %v148
    %v150 = vpop.f32.mrb[0].mxu0
    %151 = vmatprep.mubr.f32.mxu0 0.0
    %152 = vmatmul.mubr.f32.gmra.mrb[0].mxu0 %v62
    %v153 = vpop.f32.mrb[0].mxu0
    %v154 = vadd.f32 %v55, %v153
    %v155 = vpop.f32.mrb[0].mxu0
    %156 = vmatprep.mubr.f32.mxu0 0.0
    %157 = vmatmul.mubr.f32.gmra.mrb[0].mxu0 %v65
    %v158 = vpop.f32.mrb[0].mxu0
    %v159 = vadd.f32 %v55, %v158
    %v160 = vpop.f32.mrb[0].mxu0
    %161 = vmatprep.mubr.f32.mxu0 0.0
    %162 = vmatmul.mubr.f32.gmra.mrb[0].mxu0 %v68
    %v163 = vpop.f32.mrb[0].mxu0
    %v164 = vadd.f32 %v55, %v163
    %v165 = vpop.f32.mrb[0].mxu0
    %166 = vmatprep.mubr.f32.mxu0 0.0
    %167 = vmatmul.mubr.f32.gmra.mrb[0].mxu0 %v71
    %v168 = vpop.f32.mrb[0].mxu0
    %v169 = vadd.f32 %v55, %v168
    %v170 = vpop.f32.mrb[0].mxu0
    %171 = vmatprep.mubr.f32.mxu0 0.0
    %172 = vmatmul.mubr.f32.gmra.mrb[0].mxu0 %v74
    %v173 = vpop.f32.mrb[0].mxu0
    %v174 = vadd.f32 %v55, %v173
    %v175 = vpop.f32.mrb[0].mxu0
    %176 = vmatprep.mubr.f32.mxu0 0.0
    %177 = vmatmul.mubr.f32.gmra.mrb[0].mxu0 %v77
    %v178 = vpop.f32.mrb[0].mxu0
    %v179 = vadd.f32 %v55, %v178
    %v180 = vpop.f32.mrb[0].mxu0
    %181 = vmatprep.mubr.f32.mxu0 0.0
    %182 = vmatmul.mubr.f32.gmra.mrb[0].mxu0 %v80
    %v183 = vpop.f32.mrb[0].mxu0
    %v184 = vadd.f32 %v55, %v183
    %v185 = vpop.f32.mrb[0].mxu0
    %186 = vdwg.mxu0
    %v187 = vmax.f32 %v149, 0.0
    %v188 = vmax.f32 %v154, 0.0
    %v189 = vmax.f32 %v159, 0.0
    %v190 = vmax.f32 %v164, 0.0
    %v191 = vmax.f32 %v169, 0.0
    %v192 = vmax.f32 %v174, 0.0
    %v193 = vmax.f32 %v179, 0.0
    %v194 = vmax.f32 %v184, 0.0
    %v195 = vld [vmem:[%s3] sm:$0xff]
    %v196 = vld [vmem:[%s3 + $0x8] sm:$0xff]
    %v197 = vld [vmem:[%s3 + $0x10] sm:$0xff]
    %v198 = vld [vmem:[%s3 + $0x18] sm:$0xff]
    %v199 = vld [vmem:[%s3 + $0x20] sm:$0xff]
    %v200 = vld [vmem:[%s3 + $0x28] sm:$0xff]
    %v201 = vld [vmem:[%s3 + $0x30] sm:$0xff]
    %v202 = vld [vmem:[%s3 + $0x38] sm:$0xff]
    %v203 = vld [vmem:[%s4] sm:$0x1]
    %v205 = vlaneseq
    %v206 = vshrl.u32 %v205, 7
    %v207 = vsub.s32 0, %v206
    %v208 = vrot.slane %v203, %v207
    %vm210 = vcmask 523264
    %v212 = vsel %vm210, %v187, 0
    %v215 = vsel %vm210, %v188, 0
    %v218 = vsel %vm210, %v189, 0
    %v221 = vsel %vm210, %v190, 0
    %v224 = vsel %vm210, %v191, 0
    %v227 = vsel %vm210, %v192, 0
    %v230 = vsel %vm210, %v193, 0
    %v233 = vsel %vm210, %v194, 0
    %235 = vmatprep.subr.mxu0 0.0
    %236 = vmatpush1.msra.mxu0 %v195
    %237 = vmatprep.subr.mxu0 0.0
    %238 = vmatpush1.msra.mxu0 %v196
    %239 = vmatprep.subr.mxu0 0.0
    %240 = vmatpush1.msra.mxu0 %v197
    %241 = vmatprep.subr.mxu0 0.0
    %242 = vmatpush1.msra.mxu0 %v198
    %243 = vmatprep.subr.mxu0 0.0
    %244 = vmatpush1.msra.mxu0 %v199
    %245 = vmatprep.subr.mxu0 0.0
    %246 = vmatpush1.msra.mxu0 %v200
    %247 = vmatprep.subr.mxu0 0.0
    %248 = vmatpush1.msra.mxu0 %v201
    %249 = vmatprep.subr.mxu0 0.0
    %250 = vmatpush1.msra.mxu0 %v202
    %251 = vmatprep.subr.mxu0 0.0
    %252 = vmatpush1.msra.mxu0 0.0
    %253 = vmatprep.subr.mxu0 0.0
    %254 = vmatpush1.msra.mxu0 0.0
    %255 = vmatprep.subr.mxu0 0.0
    %256 = vmatpush1.msra.mxu0 0.0
    %257 = vmatprep.subr.mxu0 0.0
    %258 = vmatpush1.msra.mxu0 0.0
    %259 = vmatprep.subr.mxu0 0.0
    %260 = vmatpush1.msra.mxu0 0.0
    %261 = vmatprep.subr.mxu0 0.0
    %262 = vmatpush1.msra.mxu0 0.0
    %263 = vmatprep.subr.mxu0 0.0
    %264 = vmatpush1.msra.mxu0 0.0
    %265 = vmatprep.subr.mxu0 0.0
    %266 = vmatpush1.msra.mxu0 0.0
    %267 = vmatprep.subr.mxu0 0.0
    %268 = vmatpush1.msra.mxu0 0.0
    %269 = vmatprep.subr.mxu0 0.0
    %270 = vmatpush1.msra.mxu0 0.0
    %271 = vmatprep.subr.mxu0 0.0
    %272 = vmatpush1.msra.mxu0 0.0
    %273 = vmatprep.subr.mxu0 0.0
    %274 = vmatpush1.msra.mxu0 0.0
    %275 = vmatprep.subr.mxu0 0.0
    %276 = vmatpush1.msra.mxu0 0.0
    %277 = vmatprep.subr.mxu0 0.0
    %278 = vmatpush1.msra.mxu0 0.0
    %279 = vmatprep.subr.mxu0 0.0
    %280 = vmatpush1.msra.mxu0 0.0
    %281 = vmatprep.subr.mxu0 0.0
    %282 = vmatpush1.msra.mxu0 0.0
    %283 = vmatprep.subr.mxu0 0.0
    %284 = vmatpush1.msra.mxu0 0.0
    %285 = vmatprep.subr.mxu0 0.0
    %286 = vmatpush1.msra.mxu0 0.0
    %287 = vmatprep.subr.mxu0 0.0
    %288 = vmatpush1.msra.mxu0 0.0
    %289 = vmatprep.subr.mxu0 0.0
    %290 = vmatpush1.msra.mxu0 0.0
    %291 = vmatprep.subr.mxu0 0.0
    %292 = vmatpush1.msra.mxu0 0.0
    %293 = vmatprep.subr.mxu0 0.0
    %294 = vmatpush1.msra.mxu0 0.0
    %295 = vmatprep.subr.mxu0 0.0
    %296 = vmatpush1.msra.mxu0 0.0
    %297 = vmatprep.subr.mxu0 0.0
    %298 = vmatpush1.msra.mxu0 0.0
    %299 = vmatprep.mubr.f32.mxu0 0.0
    %300 = vmatmul.mubr.f32.gmra.mrb[0].mxu0 %v212
    %v301 = vpop.f32.mrb[0].mxu0
    %v302 = vadd.f32 %v208, %v301
    %v303 = vpop.f32.mrb[0].mxu0
    %304 = vmatprep.mubr.f32.mxu0 0.0
    %305 = vmatmul.mubr.f32.gmra.mrb[0].mxu0 %v215
    %v306 = vpop.f32.mrb[0].mxu0
    %v307 = vadd.f32 %v208, %v306
    %v308 = vpop.f32.mrb[0].mxu0
    %309 = vmatprep.mubr.f32.mxu0 0.0
    %310 = vmatmul.mubr.f32.gmra.mrb[0].mxu0 %v218
    %v311 = vpop.f32.mrb[0].mxu0
    %v312 = vadd.f32 %v208, %v311
    %v313 = vpop.f32.mrb[0].mxu0
    %314 = vmatprep.mubr.f32.mxu0 0.0
    %315 = vmatmul.mubr.f32.gmra.mrb[0].mxu0 %v221
    %v316 = vpop.f32.mrb[0].mxu0
    %v317 = vadd.f32 %v208, %v316
    %v318 = vpop.f32.mrb[0].mxu0
    %319 = vmatprep.mubr.f32.mxu0 0.0
    %320 = vmatmul.mubr.f32.gmra.mrb[0].mxu0 %v224
    %v321 = vpop.f32.mrb[0].mxu0
    %v322 = vadd.f32 %v208, %v321
    %v323 = vpop.f32.mrb[0].mxu0
    %324 = vmatprep.mubr.f32.mxu0 0.0
    %325 = vmatmul.mubr.f32.gmra.mrb[0].mxu0 %v227
    %v326 = vpop.f32.mrb[0].mxu0
    %v327 = vadd.f32 %v208, %v326
    %v328 = vpop.f32.mrb[0].mxu0
    %329 = vmatprep.mubr.f32.mxu0 0.0
    %330 = vmatmul.mubr.f32.gmra.mrb[0].mxu0 %v230
    %v331 = vpop.f32.mrb[0].mxu0
    %v332 = vadd.f32 %v208, %v331
    %v333 = vpop.f32.mrb[0].mxu0
    %334 = vmatprep.mubr.f32.mxu0 0.0
    %335 = vmatmul.mubr.f32.gmra.mrb[0].mxu0 %v233
    %v336 = vpop.f32.mrb[0].mxu0
    %v337 = vadd.f32 %v208, %v336
    %v338 = vpop.f32.mrb[0].mxu0
    %339 = vdwg.mxu0
    %v340 = vmax.f32 %v302, 0.0
    %v341 = vmax.f32 %v307, 0.0
    %v342 = vmax.f32 %v312, 0.0
    %v343 = vmax.f32 %v317, 0.0
    %v344 = vmax.f32 %v322, 0.0
    %v345 = vmax.f32 %v327, 0.0
    %v346 = vmax.f32 %v332, 0.0
    %v347 = vmax.f32 %v337, 0.0
    %v348 = vld [vmem:[#allocation2] sm:$0xff]
    %v349 = vld [vmem:[#allocation2 + $0x8] sm:$0xff]
    %v350 = vld [vmem:[#allocation2 + $0x10] sm:$0xff]
    %v351 = vld [vmem:[#allocation2 + $0x18] sm:$0xff]
    %v352 = vld [vmem:[#allocation2 + $0x20] sm:$0xff]
    %v353 = vld [vmem:[#allocation2 + $0x28] sm:$0xff]
    %v354 = vld [vmem:[#allocation2 + $0x30] sm:$0xff]
    %v355 = vld [vmem:[#allocation2 + $0x38] sm:$0xff]
    %v356 = vld [vmem:[%s6] sm:$0x1]
    %v358 = vlaneseq
    %v359 = vshrl.u32 %v358, 7
    %v360 = vsub.s32 0, %v359
    %v361 = vrot.slane %v356, %v360
    %v364 = vsel %vm210, %v340, 0
    %v367 = vsel %vm210, %v341, 0
    %v370 = vsel %vm210, %v342, 0
    %v373 = vsel %vm210, %v343, 0
    %v376 = vsel %vm210, %v344, 0
    %v379 = vsel %vm210, %v345, 0
    %v382 = vsel %vm210, %v346, 0
    %v385 = vsel %vm210, %v347, 0
    %387 = vmatprep.subr.mxu0 0.0
    %388 = vmatpush1.msra.mxu0 %v348
    %389 = vmatprep.subr.mxu0 0.0
    %390 = vmatpush1.msra.mxu0 %v349
    %391 = vmatprep.subr.mxu0 0.0
    %392 = vmatpush1.msra.mxu0 %v350
    %393 = vmatprep.subr.mxu0 0.0
    %394 = vmatpush1.msra.mxu0 %v351
    %395 = vmatprep.subr.mxu0 0.0
    %396 = vmatpush1.msra.mxu0 %v352
    %397 = vmatprep.subr.mxu0 0.0
    %398 = vmatpush1.msra.mxu0 %v353
    %399 = vmatprep.subr.mxu0 0.0
    %400 = vmatpush1.msra.mxu0 %v354
    %401 = vmatprep.subr.mxu0 0.0
    %402 = vmatpush1.msra.mxu0 %v355
    %403 = vmatprep.subr.mxu0 0.0
    %404 = vmatpush1.msra.mxu0 0.0
    %405 = vmatprep.subr.mxu0 0.0
    %406 = vmatpush1.msra.mxu0 0.0
    %407 = vmatprep.subr.mxu0 0.0
    %408 = vmatpush1.msra.mxu0 0.0
    %409 = vmatprep.subr.mxu0 0.0
    %410 = vmatpush1.msra.mxu0 0.0
    %411 = vmatprep.subr.mxu0 0.0
    %412 = vmatpush1.msra.mxu0 0.0
    %413 = vmatprep.subr.mxu0 0.0
    %414 = vmatpush1.msra.mxu0 0.0
    %415 = vmatprep.subr.mxu0 0.0
    %416 = vmatpush1.msra.mxu0 0.0
    %417 = vmatprep.subr.mxu0 0.0
    %418 = vmatpush1.msra.mxu0 0.0
    %419 = vmatprep.subr.mxu0 0.0
    %420 = vmatpush1.msra.mxu0 0.0
    %421 = vmatprep.subr.mxu0 0.0
    %422 = vmatpush1.msra.mxu0 0.0
    %423 = vmatprep.subr.mxu0 0.0
    %424 = vmatpush1.msra.mxu0 0.0
    %425 = vmatprep.subr.mxu0 0.0
    %426 = vmatpush1.msra.mxu0 0.0
    %427 = vmatprep.subr.mxu0 0.0
    %428 = vmatpush1.msra.mxu0 0.0
    %429 = vmatprep.subr.mxu0 0.0
    %430 = vmatpush1.msra.mxu0 0.0
    %431 = vmatprep.subr.mxu0 0.0
    %432 = vmatpush1.msra.mxu0 0.0
    %433 = vmatprep.subr.mxu0 0.0
    %434 = vmatpush1.msra.mxu0 0.0
    %435 = vmatprep.subr.mxu0 0.0
    %436 = vmatpush1.msra.mxu0 0.0
    %437 = vmatprep.subr.mxu0 0.0
    %438 = vmatpush1.msra.mxu0 0.0
    %439 = vmatprep.subr.mxu0 0.0
    %440 = vmatpush1.msra.mxu0 0.0
    %441 = vmatprep.subr.mxu0 0.0
    %442 = vmatpush1.msra.mxu0 0.0
    %443 = vmatprep.subr.mxu0 0.0
    %444 = vmatpush1.msra.mxu0 0.0
    %445 = vmatprep.subr.mxu0 0.0
    %446 = vmatpush1.msra.mxu0 0.0
    %447 = vmatprep.subr.mxu0 0.0
    %448 = vmatpush1.msra.mxu0 0.0
    %449 = vmatprep.subr.mxu0 0.0
    %450 = vmatpush1.msra.mxu0 0.0
    %451 = vmatprep.mubr.f32.mxu0 0.0
    %452 = vmatmul.mubr.f32.gmra.mrb[0].mxu0 %v364
    %v453 = vpop.f32.mrb[0].mxu0
    %v454 = vadd.f32 %v361, %v453
    %v455 = vpop.f32.mrb[0].mxu0
    %456 = vmatprep.mubr.f32.mxu0 0.0
    %457 = vmatmul.mubr.f32.gmra.mrb[0].mxu0 %v367
    %v458 = vpop.f32.mrb[0].mxu0
    %v459 = vadd.f32 %v361, %v458
    %v460 = vpop.f32.mrb[0].mxu0
    %461 = vmatprep.mubr.f32.mxu0 0.0
    %462 = vmatmul.mubr.f32.gmra.mrb[0].mxu0 %v370
    %v463 = vpop.f32.mrb[0].mxu0
    %v464 = vadd.f32 %v361, %v463
    %v465 = vpop.f32.mrb[0].mxu0
    %466 = vmatprep.mubr.f32.mxu0 0.0
    %467 = vmatmul.mubr.f32.gmra.mrb[0].mxu0 %v373
    %v468 = vpop.f32.mrb[0].mxu0
    %v469 = vadd.f32 %v361, %v468
    %v470 = vpop.f32.mrb[0].mxu0
    %471 = vmatprep.mubr.f32.mxu0 0.0
    %472 = vmatmul.mubr.f32.gmra.mrb[0].mxu0 %v376
    %v473 = vpop.f32.mrb[0].mxu0
    %v474 = vadd.f32 %v361, %v473
    %v475 = vpop.f32.mrb[0].mxu0
    %476 = vmatprep.mubr.f32.mxu0 0.0
    %477 = vmatmul.mubr.f32.gmra.mrb[0].mxu0 %v379
    %v478 = vpop.f32.mrb[0].mxu0
    %v479 = vadd.f32 %v361, %v478
    %v480 = vpop.f32.mrb[0].mxu0
    %481 = vmatprep.mubr.f32.mxu0 0.0
    %482 = vmatmul.mubr.f32.gmra.mrb[0].mxu0 %v382
    %v483 = vpop.f32.mrb[0].mxu0
    %v484 = vadd.f32 %v361, %v483
    %v485 = vpop.f32.mrb[0].mxu0
    %486 = vmatprep.mubr.f32.mxu0 0.0
    %487 = vmatmul.mubr.f32.gmra.mrb[0].mxu0 %v385
    %v488 = vpop.f32.mrb[0].mxu0
    %v489 = vadd.f32 %v361, %v488
    %v490 = vpop.f32.mrb[0].mxu0
    %491 = vdwg.mxu0
    %492 = vst [vmem:[#allocation5] sm:$0xff] %v454
    %493 = vst [vmem:[#allocation5 + $0x8] sm:$0xff] %v459
    %494 = vst [vmem:[#allocation5 + $0x10] sm:$0xff] %v464
    %495 = vst [vmem:[#allocation5 + $0x18] sm:$0xff] %v469
    %496 = vst [vmem:[#allocation5 + $0x20] sm:$0xff] %v474
    %497 = vst [vmem:[#allocation5 + $0x28] sm:$0xff] %v479
    %498 = vst [vmem:[#allocation5 + $0x30] sm:$0xff] %v484
    %499 = vst [vmem:[#allocation5 + $0x38] sm:$0xff] %v489
    // Predicated region
    $region34: #{tpu_custom_call.1} parent=1 // pred_check
      _
    $region35: #{tpu_custom_call.1} parent=1 // pred_check_branch
      %501 = sbr.rel (0) target = $region37
    $region36: #{tpu_custom_call.1} parent=1 // pred_region
      %s503 = ssub.s32 1024, 1024
      %504 = vsyncadd [#allocation4], %s503
      %s505 = sshll.u32 [#allocation5], 4
      %s506 = int_to_ptr.vmem [resolvable:$true] %s505
      %511 = dma.vmem_to_hbm [thread:$0]  %s506, 1024, %s7, [#allocation4], 128, 128, 8
    $region37: #{tpu_custom_call.1} parent=1 // pred_fallthru
      _
    // Predicated region
    $region38: #{tpu_custom_call.1} parent=1 // pred_check
      _
    $region39: #{tpu_custom_call.1} parent=1 // pred_check_branch
      %513 = sbr.rel (0) target = $region41
    $region40: #{tpu_custom_call.1} parent=1 // pred_region
      %514 = dma.done [#allocation4], 1024
    $region41: #{tpu_custom_call.1} parent=1 // pred_fallthru
      _
    %515 = vsyncpa [#allocation3], 1
    %516 = vsyncpa [#allocation4], 1

</llo_original>
